<compile_context>
chip_gen: v6e
topology: v6e:2x2x1
jax: 0.10.0
libtpu: 0.0.40
codegen_flags: <defaults>
</compile_context>

<pallas_src>
import functools
import numpy as np
import jax
import jax.numpy as jnp
from jax import lax
from jax.experimental import pallas as pl
from jax.experimental.pallas import tpu as pltpu

# Set True on v6e/v7x to feed bf16 operands to the MXU (accumulation stays
# f32 via preferred_element_type).  Left False so numerics match the f32
# PyTorch reference.
USE_BF16_MXU = False
VMEM_LIMIT = 32 * 1024 * 1024
NEG_INF = -1e9


def _round_up(x, m):
    return (x + m - 1) // m * m


def _mxu_cast(x):
    return x.astype(jnp.bfloat16) if USE_BF16_MXU else x


# ----------------------------------------------------------------------------
# Tiled linear (matmul + bias + optional relu)
# ----------------------------------------------------------------------------
def _matmul_kernel(x_ref, w_ref, b_ref, o_ref, acc_ref, *, activation):
    @pl.when(pl.program_id(2) == 0)
    def _():
        acc_ref[...] = jnp.zeros_like(acc_ref)

    acc_ref[...] += jnp.dot(x_ref[...], w_ref[...],
                            preferred_element_type=jnp.float32)

    @pl.when(pl.program_id(2) == pl.num_programs(2) - 1)
    def _():
        y = acc_ref[...] + b_ref[...]
        if activation == "relu":
            y = jnp.maximum(y, 0.0)
        o_ref[...] = y.astype(o_ref.dtype)


def linear(x, w, b=None, activation=None):
    """y = act(x @ w + b).  Tiled (M, N, K) matmul with a f32 VMEM accumulator."""
    lead = x.shape[:-1]
    K = x.shape[-1]
    N = w.shape[-1]
    x2 = x.reshape(-1, K)
    M = x2.shape[0]

    tm = min(256, _round_up(M, 8))
    tn = min(256, _round_up(N, 128))
    tk = min(512, _round_up(K, 128))
    Mp, Np, Kp = _round_up(M, tm), _round_up(N, tn), _round_up(K, tk)

    xp = jnp.pad(x2.astype(jnp.float32), ((0, Mp - M), (0, Kp - K)))
    wp = jnp.pad(w.astype(jnp.float32), ((0, Kp - K), (0, Np - N)))
    bv = b if b is not None else jnp.zeros((N,), jnp.float32)
    bp = jnp.pad(bv.astype(jnp.float32), (0, Np - N)).reshape(1, Np)

    xp = _mxu_cast(xp)
    wp = _mxu_cast(wp)

    grid = (Mp // tm, Np // tn, Kp // tk)
    out = pl.pallas_call(
        functools.partial(_matmul_kernel, activation=activation),
        out_shape=jax.ShapeDtypeStruct((Mp, Np), jnp.float32),
        grid=grid,
        in_specs=[
            pl.BlockSpec((tm, tk), lambda i, j, k: (i, k)),
            pl.BlockSpec((tk, tn), lambda i, j, k: (k, j)),
            pl.BlockSpec((1, tn), lambda i, j, k: (0, j)),
        ],
        out_specs=pl.BlockSpec((tm, tn), lambda i, j, k: (i, j)),
        scratch_shapes=[pltpu.VMEM((tm, tn), jnp.float32)],
        compiler_params=pltpu.CompilerParams(
            dimension_semantics=("parallel", "parallel", "arbitrary"),
            vmem_limit_bytes=VMEM_LIMIT),
        cost_estimate=pl.CostEstimate(
            flops=2 * Mp * Np * Kp, transcendentals=0,
            bytes_accessed=4 * (Mp * Kp + Kp * Np + Mp * Np)),
    )(xp, wp, bp)
    return out[:M, :N].reshape(*lead, N)


# ----------------------------------------------------------------------------
# Fused matmul + residual + LayerNorm (MHA output projection epilogue)
# ----------------------------------------------------------------------------
def _linear_add_ln_kernel(x_ref, w_ref, r_ref, g_ref, b_ref, o_ref, *, eps):
    y = jnp.dot(x_ref[...], w_ref[...], preferred_element_type=jnp.float32)
    h = y + r_ref[...]
    mean = jnp.mean(h, axis=-1, keepdims=True)
    var = jnp.mean(jnp.square(h - mean), axis=-1, keepdims=True)
    out = (h - mean) * lax.rsqrt(var + eps)
    o_ref[...] = (out * g_ref[...] + b_ref[...]).astype(o_ref.dtype)


def linear_add_ln(x, w, residual, gamma, beta, eps=1e-6):
    """out = LayerNorm(x @ w + residual)."""
    lead = x.shape[:-1]
    K = x.shape[-1]
    N = w.shape[-1]
    x2 = x.reshape(-1, K).astype(jnp.float32)
    r2 = residual.reshape(-1, N).astype(jnp.float32)
    M = x2.shape[0]
    tm = min(512, _round_up(M, 8))
    Mp = _round_up(M, tm)
    xp = _mxu_cast(jnp.pad(x2, ((0, Mp - M), (0, 0))))
    rp = jnp.pad(r2, ((0, Mp - M), (0, 0)))
    out = pl.pallas_call(
        functools.partial(_linear_add_ln_kernel, eps=eps),
        out_shape=jax.ShapeDtypeStruct((Mp, N), jnp.float32),
        grid=(Mp // tm,),
        in_specs=[
            pl.BlockSpec((tm, K), lambda i: (i, 0)),
            pl.BlockSpec((K, N), lambda i: (0, 0)),
            pl.BlockSpec((tm, N), lambda i: (i, 0)),
            pl.BlockSpec((1, N), lambda i: (0, 0)),
            pl.BlockSpec((1, N), lambda i: (0, 0)),
        ],
        out_specs=pl.BlockSpec((tm, N), lambda i: (i, 0)),
        compiler_params=pltpu.CompilerParams(
            dimension_semantics=("parallel",), vmem_limit_bytes=VMEM_LIMIT),
    )(xp, _mxu_cast(w), rp, gamma.reshape(1, N), beta.reshape(1, N))
    return out[:M].reshape(*lead, N)


# ----------------------------------------------------------------------------
# Fused position-wise FFN + residual + LayerNorm
# ----------------------------------------------------------------------------
def _ffn_add_ln_kernel(x_ref, w1_ref, b1_ref, w2_ref, b2_ref, g_ref, bt_ref,
                       o_ref, *, eps):
    x = x_ref[...]
    h = jnp.dot(x, w1_ref[...], preferred_element_type=jnp.float32) + b1_ref[...]
    h = jnp.maximum(h, 0.0)
    y = jnp.dot(h.astype(w2_ref.dtype), w2_ref[...],
                preferred_element_type=jnp.float32) + b2_ref[...]
    y = y + x.astype(jnp.float32)
    mean = jnp.mean(y, axis=-1, keepdims=True)
    var = jnp.mean(jnp.square(y - mean), axis=-1, keepdims=True)
    out = (y - mean) * lax.rsqrt(var + eps)
    o_ref[...] = (out * g_ref[...] + bt_ref[...]).astype(o_ref.dtype)


def ffn_add_ln(x, w1, b1, w2, b2, gamma, beta, eps=1e-6):
    """out = LayerNorm(relu(x @ w1 + b1) @ w2 + b2 + x)."""
    lead = x.shape[:-1]
    D = x.shape[-1]
    Di = w1.shape[-1]
    x2 = x.reshape(-1, D).astype(jnp.float32)
    M = x2.shape[0]
    tm = min(256, _round_up(M, 8))
    Mp = _round_up(M, tm)
    xp = _mxu_cast(jnp.pad(x2, ((0, Mp - M), (0, 0))))
    out = pl.pallas_call(
        functools.partial(_ffn_add_ln_kernel, eps=eps),
        out_shape=jax.ShapeDtypeStruct((Mp, D), jnp.float32),
        grid=(Mp // tm,),
        in_specs=[
            pl.BlockSpec((tm, D), lambda i: (i, 0)),
            pl.BlockSpec((D, Di), lambda i: (0, 0)),
            pl.BlockSpec((1, Di), lambda i: (0, 0)),
            pl.BlockSpec((Di, D), lambda i: (0, 0)),
            pl.BlockSpec((1, D), lambda i: (0, 0)),
            pl.BlockSpec((1, D), lambda i: (0, 0)),
            pl.BlockSpec((1, D), lambda i: (0, 0)),
        ],
        out_specs=pl.BlockSpec((tm, D), lambda i: (i, 0)),
        compiler_params=pltpu.CompilerParams(
            dimension_semantics=("parallel",), vmem_limit_bytes=VMEM_LIMIT),
    )(xp, _mxu_cast(w1), b1.reshape(1, Di), _mxu_cast(w2),
      b2.reshape(1, D), gamma.reshape(1, D), beta.reshape(1, D))
    return out[:M].reshape(*lead, D)


# ----------------------------------------------------------------------------
# Standalone LayerNorm
# ----------------------------------------------------------------------------
def _ln_kernel(x_ref, g_ref, b_ref, o_ref, *, eps):
    h = x_ref[...]
    mean = jnp.mean(h, axis=-1, keepdims=True)
    var = jnp.mean(jnp.square(h - mean), axis=-1, keepdims=True)
    out = (h - mean) * lax.rsqrt(var + eps)
    o_ref[...] = (out * g_ref[...] + b_ref[...]).astype(o_ref.dtype)


def layer_norm(x, gamma, beta, eps=1e-6):
    lead = x.shape[:-1]
    D = x.shape[-1]
    x2 = x.reshape(-1, D).astype(jnp.float32)
    M = x2.shape[0]
    tm = min(512, _round_up(M, 8))
    Mp = _round_up(M, tm)
    xp = jnp.pad(x2, ((0, Mp - M), (0, 0)))
    out = pl.pallas_call(
        functools.partial(_ln_kernel, eps=eps),
        out_shape=jax.ShapeDtypeStruct((Mp, D), jnp.float32),
        grid=(Mp // tm,),
        in_specs=[
            pl.BlockSpec((tm, D), lambda i: (i, 0)),
            pl.BlockSpec((1, D), lambda i: (0, 0)),
            pl.BlockSpec((1, D), lambda i: (0, 0)),
        ],
        out_specs=pl.BlockSpec((tm, D), lambda i: (i, 0)),
        compiler_params=pltpu.CompilerParams(
            dimension_semantics=("parallel",), vmem_limit_bytes=VMEM_LIMIT),
    )(xp, gamma.reshape(1, D), beta.reshape(1, D))
    return out[:M].reshape(*lead, D)


# ----------------------------------------------------------------------------
# Attention (per-batch grid step, heads handled inside, lane-dense output)
# ----------------------------------------------------------------------------
def _attend_heads(q, k, v, bias, n_head, d_k, d_v, scale):
    """softmax(q k^T * scale + bias) v per head; returns (Lq, n_head*d_v)."""
    outs = []
    for h in range(n_head):
        qh = q[:, h * d_k:(h + 1) * d_k]
        kh = k[:, h * d_k:(h + 1) * d_k]
        vh = v[:, h * d_v:(h + 1) * d_v]
        s = lax.dot_general(qh, kh, (((1,), (1,)), ((), ())),
                            preferred_element_type=jnp.float32) * scale
        s = s + bias
        m = jnp.max(s, axis=-1, keepdims=True)
        p = jnp.exp(s - m)
        denom = jnp.sum(p, axis=-1, keepdims=True)
        p = p * pl.reciprocal(denom, approx=True)
        outs.append(jnp.dot(p.astype(vh.dtype), vh,
                            preferred_element_type=jnp.float32))
    return jnp.concatenate(outs, axis=-1)


def _enc_attn_kernel(qk_ref, v_ref, padrows_ref, colsel_ref, qstep_ref,
                     kstep_ref, o_ref, *, n_head, d_k, d_v, scale):
    hk = n_head * d_k
    qk = qk_ref[0]                       # (L, 2*H*dk) — fused Q|K projection
    q = qk[:, :hk]
    k = qk[:, hk:]
    v = v_ref[0]                         # (L, H*dv)
    # Rebuild mask[q, k] = pad[b, q//E, k%E] & (k//E <= q//E) in-kernel:
    #   pad_rows[q, e] = pad[b, q//E, e]; col_sel[e, k] = (e == k % E).
    pad_qk = jnp.dot(padrows_ref[0], colsel_ref[...],
                     preferred_element_type=jnp.float32)       # (L, L)
    keep = (pad_qk > 0.5) & (kstep_ref[...] <= qstep_ref[...] + 0.5)
    bias = jnp.where(keep, 0.0, NEG_INF)
    o_ref[0] = _attend_heads(q, k, v, bias, n_head, d_k, d_v,
                             scale).astype(o_ref.dtype)


def _pred_attn_kernel(q_ref, kv_ref, qidx_ref, kstep_ref, o_ref, *,
                      n_head, d_k, d_v, scale):
    hk = n_head * d_k
    q = q_ref[0]                         # (S, H*dk)
    kv = kv_ref[0]                       # (L, H*dk + H*dv) — fused K|V
    k = kv[:, :hk]
    v = kv[:, hk:]
    # trg_io_mask[q, k] = (k // E <= q), rebuilt from per-position indices.
    keep = kstep_ref[...] <= qidx_ref[...] + 0.5
    bias = jnp.where(keep, 0.0, NEG_INF)
    o_ref[0] = _attend_heads(q, k, v, bias, n_head, d_k, d_v,
                             scale).astype(o_ref.dtype)


def encoder_attention(qk, v, mask_inputs, n_head, d_k, d_v):
    pad_rows, col_sel, qstep, kstep = mask_inputs
    B, L, two_hk = qk.shape
    E = pad_rows.shape[-1]
    dv_tot = n_head * d_v
    return pl.pallas_call(
        functools.partial(_enc_attn_kernel, n_head=n_head, d_k=d_k, d_v=d_v,
                          scale=1.0 / (d_k ** 0.5)),
        out_shape=jax.ShapeDtypeStruct((B, L, dv_tot), jnp.float32),
        grid=(B,),
        in_specs=[
            pl.BlockSpec((1, L, two_hk), lambda b: (b, 0, 0)),
            pl.BlockSpec((1, L, dv_tot), lambda b: (b, 0, 0)),
            pl.BlockSpec((1, L, E), lambda b: (b, 0, 0)),
            pl.BlockSpec((E, L), lambda b: (0, 0)),
            pl.BlockSpec((L, 1), lambda b: (0, 0)),
            pl.BlockSpec((1, L), lambda b: (0, 0)),
        ],
        out_specs=pl.BlockSpec((1, L, dv_tot), lambda b: (b, 0, 0)),
        compiler_params=pltpu.CompilerParams(
            dimension_semantics=("parallel",), vmem_limit_bytes=VMEM_LIMIT),
    )(_mxu_cast(qk), _mxu_cast(v), pad_rows, col_sel, qstep, kstep)


def predictor_attention(q, kv, mask_inputs, n_head, d_k, d_v):
    qidx, kstep = mask_inputs
    B, S, hk = q.shape
    L = kv.shape[1]
    hkv = kv.shape[-1]
    dv_tot = n_head * d_v
    return pl.pallas_call(
        functools.partial(_pred_attn_kernel, n_head=n_head, d_k=d_k, d_v=d_v,
                          scale=1.0 / (d_k ** 0.5)),
        out_shape=jax.ShapeDtypeStruct((B, S, dv_tot), jnp.float32),
        grid=(B,),
        in_specs=[
            pl.BlockSpec((1, S, hk), lambda b: (b, 0, 0)),
            pl.BlockSpec((1, L, hkv), lambda b: (b, 0, 0)),
            pl.BlockSpec((S, 1), lambda b: (0, 0)),
            pl.BlockSpec((1, L), lambda b: (0, 0)),
        ],
        out_specs=pl.BlockSpec((1, S, dv_tot), lambda b: (b, 0, 0)),
        compiler_params=pltpu.CompilerParams(
            dimension_semantics=("parallel",), vmem_limit_bytes=VMEM_LIMIT),
    )(_mxu_cast(q), _mxu_cast(kv), qidx, kstep)


# ----------------------------------------------------------------------------
# Compact mask inputs (no (B, L, L) HBM materialization)
# ----------------------------------------------------------------------------
def make_enc_mask_inputs(pad, n_events):
    B, S, E = pad.shape
    L = S * E
    pad_rows = jnp.repeat(pad, E, axis=1)                       # (B, L, E)
    col_sel = jnp.asarray(
        np.arange(E)[:, None] == (np.arange(L)[None, :] % E), jnp.float32)
    step = (np.arange(L) // E).astype(np.float32)
    return pad_rows, col_sel, jnp.asarray(step[:, None]), jnp.asarray(step[None, :])


def make_pred_mask_inputs(n_seq, n_events):
    L = n_seq * n_events
    qidx = jnp.asarray(np.arange(n_seq, dtype=np.float32)[:, None])
    kstep = jnp.asarray((np.arange(L) // n_events).astype(np.float32)[None, :])
    return qidx, kstep


# ----------------------------------------------------------------------------
# Model glue
# ----------------------------------------------------------------------------
def sinusoid_table(n_position, d_hid):
    pos = np.arange(n_position)[:, None].astype(np.float64)
    i = np.arange(d_hid)[None, :]
    angle = pos / np.power(10000.0, 2.0 * (i // 2) / d_hid)
    table = np.zeros((n_position, d_hid))
    table[:, 0::2] = np.sin(angle[:, 0::2])
    table[:, 1::2] = np.cos(angle[:, 1::2])
    return jnp.asarray(table, dtype=jnp.float32)


def encoder_layer(p, x, time_enc, enc_mask_inputs, n_head, d_k, d_v):
    qk_in = x + time_enc
    qk = linear(qk_in, jnp.concatenate([p["w_q"], p["w_k"]], axis=1))
    v = linear(x, p["w_v"])
    attn = encoder_attention(qk, v, enc_mask_inputs, n_head, d_k, d_v)
    h = linear_add_ln(attn, p["w_o"], x, p["ln1_g"], p["ln1_b"])
    return ffn_add_ln(h, p["w1"], p["b1"], p["w2"], p["b2"],
                      p["ln2_g"], p["ln2_b"])


def predictor_layer(p, enc_out, trg_q, pred_mask_inputs, n_head, d_k, d_v):
    kv = linear(enc_out, jnp.concatenate([p["w_k"], p["w_v"]], axis=1))
    q = linear(trg_q, p["w_q"])
    attn = predictor_attention(q, kv, pred_mask_inputs, n_head, d_k, d_v)
    h = linear_add_ln(attn, p["w_o"], trg_q, p["ln1_g"], p["ln1_b"])
    return ffn_add_ln(h, p["w1"], p["b1"], p["w2"], p["b2"],
                      p["ln2_g"], p["ln2_b"])


def transformer_forward(params, src_seq, len_seq, *, src_pad_idx, n_head,
                        d_k, d_v, pos_table):
    B, S, E = src_seq.shape
    L = S * E
    d_model = params["emb_w"].shape[1]

    pad = (src_seq != src_pad_idx).astype(jnp.float32)           # (B, S, E)
    enc_mask_inputs = make_enc_mask_inputs(pad, E)
    pred_mask_inputs = make_pred_mask_inputs(S, E)

    # torch.diag_embed(src_seq).view(B, S*E, E)
    src_diag = (src_seq[..., None] * jnp.eye(E, dtype=src_seq.dtype)
                ).reshape(B, L, E)

    # Positional ("time") encodings.
    inp_time_enc = jnp.repeat(pos_table[:S], E, axis=0)[None]    # (1, L, d)
    trg_time_enc = jnp.broadcast_to(pos_table[1:S + 1][None], (B, S, d_model))

    # ---- Encoder ----
    x = linear(src_diag, params["emb_w"])                        # src_word_emb
    for lp in params["enc_layers"]:
        x = encoder_layer(lp, x, inp_time_enc, enc_mask_inputs, n_head, d_k, d_v)
    x = layer_norm(x, params["enc_ln_g"], params["enc_ln_b"])

    # ---- Predictor (single layer) ----
    y = predictor_layer(params["pred_layer"], x, trg_time_enc,
                        pred_mask_inputs, n_head, d_k, d_v)
    y = layer_norm(y, params["pred_ln_g"], params["pred_ln_b"])
    max_seq_len = max(len_seq)      # Python-level, as in the reference
    y = y[:, :max_seq_len, :]

    # ---- Output projection ----
    return linear(y, params["prj_w"])


# ----------------------------------------------------------------------------
# Deterministic parameter init
# ----------------------------------------------------------------------------
def xavier(key, shape):
    fan_in, fan_out = shape[0], shape[1]
    limit = float(np.sqrt(6.0 / (fan_in + fan_out)))
    return jax.random.uniform(key, shape, jnp.float32, -limit, limit)


def layer_params(key, d_model, d_inner, n_head, d_k, d_v):
    ks = jax.random.split(key, 6)
    return dict(
        w_q=xavier(ks[0], (d_model, n_head * d_k)),
        w_k=xavier(ks[1], (d_model, n_head * d_k)),
        w_v=xavier(ks[2], (d_model, n_head * d_v)),
        w_o=xavier(ks[3], (n_head * d_v, d_model)),
        ln1_g=jnp.ones((d_model,), jnp.float32),
        ln1_b=jnp.zeros((d_model,), jnp.float32),
        w1=xavier(ks[4], (d_model, d_inner)),
        b1=jnp.zeros((d_inner,), jnp.float32),
        w2=xavier(ks[5], (d_inner, d_model)),
        b2=jnp.zeros((d_model,), jnp.float32),
        ln2_g=jnp.ones((d_model,), jnp.float32),
        ln2_b=jnp.zeros((d_model,), jnp.float32),
    )


def init_params(key, n_src_vocab, n_trg_vocab, d_model, d_inner, n_layers,
                n_head, d_k, d_v):
    keys = jax.random.split(key, n_layers + 3)
    return dict(
        emb_w=xavier(keys[0], (n_src_vocab, d_model)),
        enc_layers=[layer_params(keys[1 + l], d_model, d_inner, n_head, d_k, d_v)
                    for l in range(n_layers)],
        enc_ln_g=jnp.ones((d_model,), jnp.float32),
        enc_ln_b=jnp.zeros((d_model,), jnp.float32),
        pred_layer=layer_params(keys[n_layers + 1], d_model, d_inner, n_head,
                                d_k, d_v),
        pred_ln_g=jnp.ones((d_model,), jnp.float32),
        pred_ln_b=jnp.zeros((d_model,), jnp.float32),
        prj_w=xavier(keys[n_layers + 2], (d_model, n_trg_vocab)),
    )


# ----------------------------------------------------------------------------
if __name__ == "__main__":
    B, S, E = 2, 4, 4                   # batch, time-steps, events
    n_src_vocab = n_trg_vocab = E       # implied by Linear(n_src_vocab, d) on (..., E)
    d_model = d_word_vec = 32
    d_inner = 64
    n_layers = 2
    n_head = 2
    d_k = d_v = 16
    n_position = 64
    src_pad_idx = 0

    key = jax.random.PRNGKey(0)
    k_data, k_params = jax.random.split(key)

    src_seq = jax.random.randint(k_data, (B, S, E), 0, 5).astype(jnp.float32)
    len_seq = [S, S]

    params = init_params(k_params, n_src_vocab, n_trg_vocab, d_model, d_inner,
                         n_layers, n_head, d_k, d_v)
    pos_table = sinusoid_table(n_position, d_word_vec)

    out = transformer_forward(params, src_seq, len_seq,
                              src_pad_idx=src_pad_idx, n_head=n_head,
                              d_k=d_k, d_v=d_v, pos_table=pos_table)
    out = jax.block_until_ready(out)

    assert out.shape == (B, S, n_trg_vocab), out.shape
    assert bool(jnp.all(jnp.isfinite(out)))
    print("KERNEL_OK")
</pallas_src>

<mosaic_0001>
module attributes {stable_mosaic.version = 11 : i64} {
  func.func @_matmul_kernel(%arg0: i32, %arg1: i32, %arg2: i32, %arg3: memref<32x128xf32, #tpu.memory_space<vmem>>, %arg4: memref<128x128xf32, #tpu.memory_space<vmem>>, %arg5: memref<1x128xf32, #tpu.memory_space<vmem>>, %arg6: memref<32x128xf32, #tpu.memory_space<vmem>>, %arg7: memref<32x128xf32, #tpu.memory_space<vmem>>) attributes {dimension_semantics = [#tpu.dimension_semantics<parallel>, #tpu.dimension_semantics<parallel>, #tpu.dimension_semantics<arbitrary>], iteration_bounds = array<i64: 1, 1, 1>, scalar_prefetch = 0 : i64, scratch_operands = 1 : i64, tpu.core_type = #tpu.core_type<tc>, window_params = [{transform_indices = @transform_0, window_bounds = array<i64: 32, 128>}, {transform_indices = @transform_1, window_bounds = array<i64: 128, 128>}, {transform_indices = @transform_2, window_bounds = array<i64: 1, 128>}, {transform_indices = @transform_3, window_bounds = array<i64: 32, 128>}]} {
    %c0_i32 = arith.constant 0 : i32
    %0 = arith.cmpi eq, %arg2, %c0_i32 : i32
    %1 = arith.extui %0 : i1 to i32
    %c0_i32_0 = arith.constant 0 : i32
    %2 = arith.cmpi ne, %1, %c0_i32_0 : i32
    scf.if %2 {
      %cst_10 = arith.constant 0.000000e+00 : f32
      %12 = vector.broadcast %cst_10 : f32 to vector<32x128xf32>
      %c0_11 = arith.constant 0 : index
      %c0_12 = arith.constant 0 : index
      %13 = vector.load %arg7[%c0_11, %c0_12] : memref<32x128xf32, #tpu.memory_space<vmem>>, vector<32x128xf32>
      tpu.vector_store %arg7[%c0_11, %c0_12], %12 {strides = array<i32>} : memref<32x128xf32, #tpu.memory_space<vmem>>, vector<32x128xf32>,
    } else {
    }
    %c0 = arith.constant 0 : index
    %c0_1 = arith.constant 0 : index
    %3 = vector.load %arg7[%c0, %c0_1] : memref<32x128xf32, #tpu.memory_space<vmem>>, vector<32x128xf32>
    %c0_2 = arith.constant 0 : index
    %c0_3 = arith.constant 0 : index
    %4 = vector.load %arg3[%c0_2, %c0_3] : memref<32x128xf32, #tpu.memory_space<vmem>>, vector<32x128xf32>
    %c0_4 = arith.constant 0 : index
    %c0_5 = arith.constant 0 : index
    %5 = vector.load %arg4[%c0_4, %c0_5] : memref<128x128xf32, #tpu.memory_space<vmem>>, vector<128x128xf32>
    %cst = arith.constant dense<0.000000e+00> : vector<32x128xf32>
    %6 = tpu.matmul %4, %5, %cst {dimension_numbers = #tpu.dot_dimension_numbers<[1], [0], [0], [1], [0, 0, 1, 1], [], []>} : vector<32x128xf32>, vector<128x128xf32>, vector<32x128xf32> -> vector<32x128xf32>
    %7 = arith.addf %3, %6 : vector<32x128xf32>
    %c0_6 = arith.constant 0 : index
    %c0_7 = arith.constant 0 : index
    %8 = vector.load %arg7[%c0_6, %c0_7] : memref<32x128xf32, #tpu.memory_space<vmem>>, vector<32x128xf32>
    tpu.vector_store %arg7[%c0_6, %c0_7], %7 {strides = array<i32>} : memref<32x128xf32, #tpu.memory_space<vmem>>, vector<32x128xf32>,
    %c0_i32_8 = arith.constant 0 : i32
    %9 = arith.cmpi eq, %arg2, %c0_i32_8 : i32
    %10 = arith.extui %9 : i1 to i32
    %c0_i32_9 = arith.constant 0 : i32
    %11 = arith.cmpi ne, %10, %c0_i32_9 : i32
    scf.if %11 {
      %c0_10 = arith.constant 0 : index
      %c0_11 = arith.constant 0 : index
      %12 = vector.load %arg7[%c0_10, %c0_11] : memref<32x128xf32, #tpu.memory_space<vmem>>, vector<32x128xf32>
      %c0_12 = arith.constant 0 : index
      %c0_13 = arith.constant 0 : index
      %13 = vector.load %arg5[%c0_12, %c0_13] : memref<1x128xf32, #tpu.memory_space<vmem>>, vector<1x128xf32>
      %14 = vector.broadcast %13 : vector<1x128xf32> to vector<32x128xf32>
      %15 = arith.addf %12, %14 : vector<32x128xf32>
      %c0_14 = arith.constant 0 : index
      %c0_15 = arith.constant 0 : index
      %16 = vector.load %arg6[%c0_14, %c0_15] : memref<32x128xf32, #tpu.memory_space<vmem>>, vector<32x128xf32>
      tpu.vector_store %arg6[%c0_14, %c0_15], %15 {strides = array<i32>} : memref<32x128xf32, #tpu.memory_space<vmem>>, vector<32x128xf32>,
    } else {
    }
    return
  }
  func.func @transform_0(%arg0: i32, %arg1: i32, %arg2: i32) -> (i32, i32) {
    %c0_i32 = arith.constant 0 : i32
    return %arg0, %arg2 : i32, i32
  }
  func.func @transform_1(%arg0: i32, %arg1: i32, %arg2: i32) -> (i32, i32) {
    %c0_i32 = arith.constant 0 : i32
    return %arg2, %arg1 : i32, i32
  }
  func.func @transform_2(%arg0: i32, %arg1: i32, %arg2: i32) -> (i32, i32) {
    %c0_i32 = arith.constant 0 : i32
    %c0_i32_0 = arith.constant 0 : i32
    return %c0_i32, %arg1 : i32, i32
  }
  func.func @transform_3(%arg0: i32, %arg1: i32, %arg2: i32) -> (i32, i32) {
    %c0_i32 = arith.constant 0 : i32
    return %arg0, %arg1 : i32, i32
  }
}

</mosaic_0001>

<llo_original>
// kernel: tpu_custom_call.1
$region0: #{tpu_custom_call.1}
  #allocation0 [shape = 'u32[]', space=smem, size = 0x4, offset = 0x4, fixed_abs, tag = 'smem constant byte address 0x4 - core index']
  #allocation1 [shape = 'u32[144,128]{1,0:T(1,128)}', space=vmem, size = 0x12000, scoped, tag = 'internal scratch']
  #allocation2 [shape = 'f32[32,128]{1,0:T(8,128)}', space=vmem, size = 0x4000, scoped, tag = 'scratch operand']
  %s0 = inlined_call_operand.hbm [shape: f32[32,128], index: 0, kind: input, shape index: {}]
  %s1 = inlined_call_operand.hbm [shape: f32[128,128], index: 1, kind: input, shape index: {}]
  %s2 = inlined_call_operand.vmem [shape: f32[1,128], index: 2, kind: input, shape index: {}]
  %s3 = inlined_call_operand.hbm [shape: f32[32,128], index: 3, kind: output, shape index: {}]
  %s4 = sld [smem:[#allocation0]]
  $region38: #{tpu_custom_call.1} parent=0
    _
  %s6 = ssub.s32 1, %s4
  %s7 = scalar_select 0, %s6, %s4
  $region1: #{tpu_custom_call.1} parent=0
    #allocation3 [shape = 'u8[16384]{0}', space=vmem, size = 0x4000, scoped, tag = 'input window, operand 0, single buffered']
    #allocation4 [shape = 's32[1]{0}', space=sflag, size = 0x4, scoped, tag = 'scoped memory for tpu_custom_call.1']
    #allocation5 [shape = 's32[1]{0}', space=sflag, size = 0x4, scoped, tag = 'scoped memory for tpu_custom_call.1']
    #allocation6 [shape = 'u8[65536]{0}', space=vmem, size = 0x10000, scoped, tag = 'input window, operand 1, single buffered']
    #allocation7 [shape = 's32[1]{0}', space=sflag, size = 0x4, scoped, tag = 'scoped memory for tpu_custom_call.1']
    #allocation8 [shape = 'u8[16384]{0}', space=vmem, size = 0x4000, scoped, tag = 'output window, operand 0, single buffered']
    %8 = vsyncpa [#allocation4], 0
    %9 = vsyncpa [#allocation7], 0
    %10 = vsyncpa [#allocation5], 0
    // Predicated region
    $region2: #{tpu_custom_call.1} parent=1 // pred_check
      _
    $region3: #{tpu_custom_call.1} parent=1 // pred_check_branch
      %12 = sbr.rel (0) target = $region5
    $region4: #{tpu_custom_call.1} parent=1 // pred_region
      %s14 = ssub.s32 512, 512
      %15 = vsyncadd [#allocation4], %s14
      %s16 = sshll.u32 [#allocation3], 4
      %s17 = int_to_ptr.vmem [resolvable:$true] %s16
      %22 = dma.hbm_to_vmem [thread:$0]  %s0, 512, %s17, [#allocation4], 128, 128, 8
    $region5: #{tpu_custom_call.1} parent=1 // pred_fallthru
      _
    // Predicated region
    $region6: #{tpu_custom_call.1} parent=1 // pred_check
      _
    $region7: #{tpu_custom_call.1} parent=1 // pred_check_branch
      %24 = sbr.rel (0) target = $region9
    $region8: #{tpu_custom_call.1} parent=1 // pred_region
      %s26 = ssub.s32 2048, 2048
      %27 = vsyncadd [#allocation7], %s26
      %s28 = sshll.u32 [#allocation6], 4
      %s29 = int_to_ptr.vmem [resolvable:$true] %s28
      %34 = dma.hbm_to_vmem [thread:$0]  %s1, 2048, %s29, [#allocation7], 128, 128, 8
    $region9: #{tpu_custom_call.1} parent=1 // pred_fallthru
      _
    // Predicated region
    $region10: #{tpu_custom_call.1} parent=1 // pred_check
      _
    $region11: #{tpu_custom_call.1} parent=1 // pred_check_branch
      %36 = sbr.rel (0) target = $region13
    $region12: #{tpu_custom_call.1} parent=1 // pred_region
      _
    $region13: #{tpu_custom_call.1} parent=1 // pred_fallthru
      _
    // Predicated region
    $region14: #{tpu_custom_call.1} parent=1 // pred_check
      _
    $region15: #{tpu_custom_call.1} parent=1 // pred_check_branch
      %38 = sbr.rel (0) target = $region17
    $region16: #{tpu_custom_call.1} parent=1 // pred_region
      %39 = dma.done [#allocation4], 512
    $region17: #{tpu_custom_call.1} parent=1 // pred_fallthru
      _
    // Predicated region
    $region18: #{tpu_custom_call.1} parent=1 // pred_check
      _
    $region19: #{tpu_custom_call.1} parent=1 // pred_check_branch
      %41 = sbr.rel (0) target = $region21
    $region20: #{tpu_custom_call.1} parent=1 // pred_region
      %42 = dma.done [#allocation7], 2048
    $region21: #{tpu_custom_call.1} parent=1 // pred_fallthru
      _
    %p43 = scmp.eq.s32.totalorder 0, 0
    // Predicated region
    $region22: #{tpu_custom_call.1} parent=1 // pred_check
      %p44 = pneg %p43
    $region23: #{tpu_custom_call.1} parent=1 // pred_check_branch
      %46 = sbr.rel (%p44) target = $region25
    $region24: #{tpu_custom_call.1} parent=1 // pred_region
      %47 = vst [vmem:[#allocation2] sm:$0xff] 0.0
      %48 = vst [vmem:[#allocation2 + $0x8] sm:$0xff] 0.0
      %49 = vst [vmem:[#allocation2 + $0x10] sm:$0xff] 0.0
      %50 = vst [vmem:[#allocation2 + $0x18] sm:$0xff] 0.0
    $region25: #{tpu_custom_call.1} parent=1 // pred_fallthru
      _
    %v51 = vld [vmem:[#allocation2] sm:$0xff]
    %v52 = vld [vmem:[#allocation2 + $0x8] sm:$0xff]
    %v53 = vld [vmem:[#allocation2 + $0x10] sm:$0xff]
    %v54 = vld [vmem:[#allocation2 + $0x18] sm:$0xff]
    %v55 = vld [vmem:[#allocation3] sm:$0xff]
    %v56 = vld [vmem:[#allocation3 + $0x8] sm:$0xff]
    %v57 = vld [vmem:[#allocation3 + $0x10] sm:$0xff]
    %v58 = vld [vmem:[#allocation3 + $0x18] sm:$0xff]
    %v59 = vld [vmem:[#allocation6] sm:$0xff]
    %v60 = vld [vmem:[#allocation6 + $0x8] sm:$0xff]
    %v61 = vld [vmem:[#allocation6 + $0x10] sm:$0xff]
    %v62 = vld [vmem:[#allocation6 + $0x18] sm:$0xff]
    %v63 = vld [vmem:[#allocation6 + $0x20] sm:$0xff]
    %v64 = vld [vmem:[#allocation6 + $0x28] sm:$0xff]
    %v65 = vld [vmem:[#allocation6 + $0x30] sm:$0xff]
    %v66 = vld [vmem:[#allocation6 + $0x38] sm:$0xff]
    %v67 = vld [vmem:[#allocation6 + $0x40] sm:$0xff]
    %v68 = vld [vmem:[#allocation6 + $0x48] sm:$0xff]
    %v69 = vld [vmem:[#allocation6 + $0x50] sm:$0xff]
    %v70 = vld [vmem:[#allocation6 + $0x58] sm:$0xff]
    %v71 = vld [vmem:[#allocation6 + $0x60] sm:$0xff]
    %v72 = vld [vmem:[#allocation6 + $0x68] sm:$0xff]
    %v73 = vld [vmem:[#allocation6 + $0x70] sm:$0xff]
    %v74 = vld [vmem:[#allocation6 + $0x78] sm:$0xff]
    %75 = vmatprep.subr.mxu0 0.0
    %76 = vmatpush1.msra.mxu0 %v74
    %77 = vmatprep.subr.mxu0 0.0
    %78 = vmatpush1.msra.mxu0 %v73
    %79 = vmatprep.subr.mxu0 0.0
    %80 = vmatpush1.msra.mxu0 %v72
    %81 = vmatprep.subr.mxu0 0.0
    %82 = vmatpush1.msra.mxu0 %v71
    %83 = vmatprep.subr.mxu0 0.0
    %84 = vmatpush1.msra.mxu0 %v70
    %85 = vmatprep.subr.mxu0 0.0
    %86 = vmatpush1.msra.mxu0 %v69
    %87 = vmatprep.subr.mxu0 0.0
    %88 = vmatpush1.msra.mxu0 %v68
    %89 = vmatprep.subr.mxu0 0.0
    %90 = vmatpush1.msra.mxu0 %v67
    %91 = vmatprep.subr.mxu0 0.0
    %92 = vmatpush1.msra.mxu0 %v66
    %93 = vmatprep.subr.mxu0 0.0
    %94 = vmatpush1.msra.mxu0 %v65
    %95 = vmatprep.subr.mxu0 0.0
    %96 = vmatpush1.msra.mxu0 %v64
    %97 = vmatprep.subr.mxu0 0.0
    %98 = vmatpush1.msra.mxu0 %v63
    %99 = vmatprep.subr.mxu0 0.0
    %100 = vmatpush1.msra.mxu0 %v62
    %101 = vmatprep.subr.mxu0 0.0
    %102 = vmatpush1.msra.mxu0 %v61
    %103 = vmatprep.subr.mxu0 0.0
    %104 = vmatpush1.msra.mxu0 %v60
    %105 = vmatprep.subr.mxu0 0.0
    %106 = vmatpush1.msra.mxu0 %v59
    %107 = vmatprep.subr.mxu0 0.0
    %108 = vmatpush2.msra.mxu0 0.0
    %109 = vmatprep.subr.mxu0 0.0
    %110 = vmatpush2.msra.mxu0 0.0
    %111 = vmatprep.subr.mxu0 0.0
    %112 = vmatpush2.msra.mxu0 0.0
    %113 = vmatprep.subr.mxu0 0.0
    %114 = vmatpush2.msra.mxu0 0.0
    %115 = vmatprep.subr.mxu0 0.0
    %116 = vmatpush2.msra.mxu0 0.0
    %117 = vmatprep.subr.mxu0 0.0
    %118 = vmatpush2.msra.mxu0 0.0
    %119 = vmatprep.subr.mxu0 0.0
    %120 = vmatpush2.msra.mxu0 0.0
    %121 = vmatprep.subr.mxu0 0.0
    %122 = vmatpush2.msra.mxu0 0.0
    %123 = vmatprep.subr.mxu0 0.0
    %124 = vmatpush2.msra.mxu0 0.0
    %125 = vmatprep.subr.mxu0 0.0
    %126 = vmatpush2.msra.mxu0 0.0
    %127 = vmatprep.subr.mxu0 0.0
    %128 = vmatpush2.msra.mxu0 0.0
    %129 = vmatprep.subr.mxu0 0.0
    %130 = vmatpush2.msra.mxu0 0.0
    %131 = vmatprep.subr.mxu0 0.0
    %132 = vmatpush2.msra.mxu0 0.0
    %133 = vmatprep.subr.mxu0 0.0
    %134 = vmatpush2.msra.mxu0 0.0
    %135 = vmatprep.subr.mxu0 0.0
    %136 = vmatpush2.msra.mxu0 0.0
    %137 = vmatprep.subr.mxu0 0.0
    %138 = vmatpush2.msra.mxu0 0.0
    %139 = vmatprep.mubr.f32.mxu0 0.0
    %140 = vmatmul.mubr.f32.gmra.mxu0 %v55
    %v141 = vpop.f32.mrf.mxu0
    %v142 = vadd.f32 0.0, %v141
    %v143 = vpop.f32.mrf.mxu0
    %144 = vmatprep.mubr.f32.mxu0 0.0
    %145 = vmatmul.mubr.f32.gmra.mxu0 %v56
    %v146 = vpop.f32.mrf.mxu0
    %v147 = vadd.f32 0.0, %v146
    %v148 = vpop.f32.mrf.mxu0
    %149 = vmatprep.mubr.f32.mxu0 0.0
    %150 = vmatmul.mubr.f32.gmra.mxu0 %v57
    %v151 = vpop.f32.mrf.mxu0
    %v152 = vadd.f32 0.0, %v151
    %v153 = vpop.f32.mrf.mxu0
    %154 = vmatprep.mubr.f32.mxu0 0.0
    %155 = vmatmul.mubr.f32.gmra.mxu0 %v58
    %v156 = vpop.f32.mrf.mxu0
    %v157 = vadd.f32 0.0, %v156
    %v158 = vpop.f32.mrf.mxu0
    %159 = vdwg.mxu0
    %v160 = vadd.f32 %v51, %v142
    %v161 = vadd.f32 %v52, %v147
    %v162 = vadd.f32 %v53, %v152
    %v163 = vadd.f32 %v54, %v157
    %164 = vst [vmem:[#allocation2] sm:$0xff] %v160
    %165 = vst [vmem:[#allocation2 + $0x8] sm:$0xff] %v161
    %166 = vst [vmem:[#allocation2 + $0x10] sm:$0xff] %v162
    %167 = vst [vmem:[#allocation2 + $0x18] sm:$0xff] %v163
    // Predicated region
    $region26: #{tpu_custom_call.1} parent=1 // pred_check
      %p168 = pneg %p43
    $region27: #{tpu_custom_call.1} parent=1 // pred_check_branch
      %170 = sbr.rel (%p168) target = $region29
    $region28: #{tpu_custom_call.1} parent=1 // pred_region
      %v171 = vld [vmem:[#allocation2] sm:$0xff]
      %v172 = vld [vmem:[#allocation2 + $0x8] sm:$0xff]
      %v173 = vld [vmem:[#allocation2 + $0x10] sm:$0xff]
      %v174 = vld [vmem:[#allocation2 + $0x18] sm:$0xff]
      %v175 = vld [vmem:[%s2] sm:$0x1]
      %v177 = vlaneseq
      %v178 = vshrl.u32 %v177, 7
      %v179 = vsub.s32 0, %v178
      %v180 = vrot.slane %v175, %v179
      %v182 = vadd.f32 %v171, %v180
      %v183 = vadd.f32 %v172, %v180
      %v184 = vadd.f32 %v173, %v180
      %v185 = vadd.f32 %v174, %v180
      %186 = vst [vmem:[#allocation8] sm:$0xff] %v182
      %187 = vst [vmem:[#allocation8 + $0x8] sm:$0xff] %v183
      %188 = vst [vmem:[#allocation8 + $0x10] sm:$0xff] %v184
      %189 = vst [vmem:[#allocation8 + $0x18] sm:$0xff] %v185
    $region29: #{tpu_custom_call.1} parent=1 // pred_fallthru
      _
    // Predicated region
    $region30: #{tpu_custom_call.1} parent=1 // pred_check
      _
    $region31: #{tpu_custom_call.1} parent=1 // pred_check_branch
      %191 = sbr.rel (0) target = $region33
    $region32: #{tpu_custom_call.1} parent=1 // pred_region
      %s193 = ssub.s32 512, 512
      %194 = vsyncadd [#allocation5], %s193
      %s195 = sshll.u32 [#allocation8], 4
      %s196 = int_to_ptr.vmem [resolvable:$true] %s195
      %201 = dma.vmem_to_hbm [thread:$0]  %s196, 512, %s3, [#allocation5], 128, 128, 8
    $region33: #{tpu_custom_call.1} parent=1 // pred_fallthru
      _
    // Predicated region
    $region34: #{tpu_custom_call.1} parent=1 // pred_check
      _
    $region35: #{tpu_custom_call.1} parent=1 // pred_check_branch
      %203 = sbr.rel (0) target = $region37
    $region36: #{tpu_custom_call.1} parent=1 // pred_region
      %204 = dma.done [#allocation5], 512
    $region37: #{tpu_custom_call.1} parent=1 // pred_fallthru
      _
    %205 = vsyncpa [#allocation4], 1
    %206 = vsyncpa [#allocation7], 1
    %207 = vsyncpa [#allocation5], 1

</llo_original>
